<compile_context>
chip_gen: v7x
topology: tpu7x:2x2x1
jax: 0.10.0
libtpu: 0.0.40
codegen_flags: <defaults>
</compile_context>

<pallas_src>
import jax
import jax.numpy as jnp
import numpy as np
from jax import lax
from jax.experimental import pallas as pl
from jax.experimental.pallas import tpu as pltpu

# ---- loss hyper-parameters (module defaults) --------------------------------
W_TEMPORAL = 0.3
W_UNCERTAINTY = 0.4
W_PREDICTION = 0.3
W_CONTRASTIVE = 0.1
SMOOTHNESS_WEIGHT = 0.5      # TemporalConsistencyLoss
MIN_UNCERTAINTY = 1e-6       # UncertaintyCalibrationLoss
TEMPERATURE = 0.07           # RegimePredictionLoss
INV_TEMPERATURE = 1.0 / TEMPERATURE
NORM_EPS = 1e-12             # F.normalize default eps (clamp on the norm)
NORM_EPS_SQ = NORM_EPS * NORM_EPS

# Contract the last (D) dim of both operands: the MXU takes the transposed
# RHS directly, no materialized transpose needed.
_CONTRACT_D = (((1,), (1,)), ((), ()))


def rde_loss_kernel(mu_c_ref, sig_c_ref, mu_p_ref, mu_n_ref, tgt_ref,
                    neg_ref, w_ref, b_ref, out_ref):
    mu_c = mu_c_ref[...].astype(jnp.float32)     # [B, D]
    sig_c = sig_c_ref[...].astype(jnp.float32)   # [B, D]
    mu_p = mu_p_ref[...].astype(jnp.float32)     # [B, D]
    mu_n = mu_n_ref[...].astype(jnp.float32)     # [B, D]
    tgt = tgt_ref[...].astype(jnp.float32)       # [B, T]
    neg = neg_ref[...].astype(jnp.float32)       # [N, D]
    w = w_ref[...].astype(jnp.float32)           # [T, D]  (PyTorch Linear layout)
    b = b_ref[...].astype(jnp.float32)           # [1, T]

    B, D = mu_c.shape
    T = tgt.shape[1]
    inv_b = 1.0 / float(B)

    # ---------------- temporal consistency ----------------
    diff = mu_c - mu_p
    d2 = jnp.sum(diff * diff, axis=-1, keepdims=True)             # [B, 1]
    d = jnp.sqrt(d2)
    uw = 1.0 / (1.0 + jnp.mean(sig_c, axis=-1, keepdims=True))    # [B, 1]
    temporal = jnp.sum(uw * d2 + SMOOTHNESS_WEIGHT * d, keepdims=True) * inv_b

    # ---------------- uncertainty calibration (NLL) ----------------
    proj_mu = lax.dot_general(mu_c, w, _CONTRACT_D,
                              preferred_element_type=jnp.float32) + b   # [B, T]
    proj_sig = lax.dot_general(sig_c, w, _CONTRACT_D,
                               preferred_element_type=jnp.float32) + b  # [B, T]
    s2 = proj_sig * proj_sig + MIN_UNCERTAINTY
    err = proj_mu - tgt
    nll = 0.5 * (err * err / s2 + jnp.log(s2))                     # exact divide kept
    uncertainty = jnp.sum(nll, keepdims=True) * (1.0 / float(B * T))

    # ---------------- next-step prediction (MSE) ----------------
    pd = mu_c - mu_n
    prediction = jnp.sum(pd * pd, keepdims=True) * (1.0 / float(B * D))

    # ---------------- contrastive InfoNCE (label = 0) ----------------
    # F.normalize eps clamp applied in squared-norm space (exactly equivalent).
    inv_c = lax.rsqrt(jnp.maximum(jnp.sum(mu_c * mu_c, axis=-1, keepdims=True),
                                  NORM_EPS_SQ))                    # [B, 1]
    inv_n = lax.rsqrt(jnp.maximum(jnp.sum(mu_n * mu_n, axis=-1, keepdims=True),
                                  NORM_EPS_SQ))                    # [B, 1]
    inv_g = lax.rsqrt(jnp.maximum(jnp.sum(neg * neg, axis=-1, keepdims=True),
                                  NORM_EPS_SQ))                    # [N, 1]
    mu_c_hat = mu_c * inv_c
    mu_n_hat = mu_n * inv_n
    neg_hat = neg * inv_g                                          # row-wise, no transpose
    pos = jnp.sum(mu_c_hat * mu_n_hat, axis=-1,
                  keepdims=True) * INV_TEMPERATURE                 # [B, 1]
    neg_sim = lax.dot_general(mu_c_hat, neg_hat, _CONTRACT_D,
                              preferred_element_type=jnp.float32) * INV_TEMPERATURE  # [B, N]

    # logsumexp over [pos | neg_sim] without concat
    m = jnp.maximum(pos, jnp.max(neg_sim, axis=-1, keepdims=True))
    lse = m + jnp.log(jnp.exp(pos - m) +
                      jnp.sum(jnp.exp(neg_sim - m), axis=-1, keepdims=True))
    contrastive = jnp.sum(lse - pos, keepdims=True) * inv_b

    total = (W_TEMPORAL * temporal + W_UNCERTAINTY * uncertainty +
             W_PREDICTION * prediction + W_CONTRASTIVE * contrastive)

    # ---- all 5 scalars into lanes 0..4 of this instance's (1, 8) row ----
    lane = lax.broadcasted_iota(jnp.int32, (1, 8), 1)
    out_ref[...] = jnp.where(lane == 0, temporal,
                   jnp.where(lane == 1, uncertainty,
                   jnp.where(lane == 2, prediction,
                   jnp.where(lane == 3, contrastive,
                   jnp.where(lane == 4, total, 0.0)))))


def rde_communication_loss_batched(mu_current, sigma_current, mu_previous,
                                   mu_next, regime_targets, negative_samples,
                                   proj_w, proj_b):
    """Batched over independent loss instances.

    mu_current / sigma_current / mu_previous / mu_next: [I, B, D]
    regime_targets: [I, B, T]; negative_samples: [I, N, D]
    proj_w: [T, D] (PyTorch nn.Linear layout); proj_b: [T]  (shared).
    Returns a [I, 8] array: lanes 0..4 = temporal, uncertainty, prediction,
    contrastive, total per instance.
    """
    I, B, D = mu_current.shape
    T = regime_targets.shape[-1]
    N = negative_samples.shape[-2]

    emb_spec = pl.BlockSpec((None, B, D), lambda i: (i, 0, 0))
    tgt_spec = pl.BlockSpec((None, B, T), lambda i: (i, 0, 0))
    neg_spec = pl.BlockSpec((None, N, D), lambda i: (i, 0, 0))
    w_spec = pl.BlockSpec((T, D), lambda i: (0, 0))      # shared across instances
    b_spec = pl.BlockSpec((1, T), lambda i: (0, 0))
    out_spec = pl.BlockSpec((None, 1, 8), lambda i: (i, 0, 0))

    out = pl.pallas_call(
        rde_loss_kernel,
        out_shape=jax.ShapeDtypeStruct((I, 1, 8), jnp.float32),
        grid=(I,),
        in_specs=[emb_spec, emb_spec, emb_spec, emb_spec, tgt_spec,
                  neg_spec, w_spec, b_spec],
        out_specs=out_spec,
        compiler_params=pltpu.CompilerParams(
            dimension_semantics=("parallel",)),   # v7x: shard instances over 2 TCs
    )(mu_current, sigma_current, mu_previous, mu_next, regime_targets,
      negative_samples, proj_w, proj_b.reshape(1, T))
    return out[:, 0, :]                                   # [I, 8]


def rde_communication_loss(mu_current, sigma_current, mu_previous, mu_next,
                           regime_targets, negative_samples, proj_w, proj_b):
    """Single-instance API matching the PyTorch module forward (all inputs given)."""
    # TODO(synk): the module's optional-None branches (skip a component when its
    # input is None) are compile-time wrapper logic; only the all-present path
    # is implemented in-kernel.
    row = rde_communication_loss_batched(
        mu_current[None], sigma_current[None], mu_previous[None], mu_next[None],
        regime_targets[None], negative_samples[None], proj_w, proj_b)[0]
    return {
        'temporal': row[0],
        'uncertainty': row[1],
        'prediction': row[2],
        'contrastive': row[3],
        'total': row[4],
    }


# --------------------------- pure-JAX reference ---------------------------
def reference_losses(mu_c, sig_c, mu_p, mu_n, tgt, neg, W, b):
    # temporal
    d = jnp.linalg.norm(mu_c - mu_p, axis=-1)
    uw = 1.0 / (1.0 + sig_c.mean(axis=-1))
    temporal = jnp.mean(uw * d ** 2 + SMOOTHNESS_WEIGHT * d)
    # uncertainty
    pm = mu_c @ W.T + b
    ps = sig_c @ W.T + b
    s2 = ps ** 2 + MIN_UNCERTAINTY
    uncertainty = jnp.mean(0.5 * ((pm - tgt) ** 2 / s2 + jnp.log(s2)))
    # prediction
    prediction = jnp.mean((mu_c - mu_n) ** 2)
    # contrastive
    def nrm(x):
        return x / jnp.maximum(jnp.linalg.norm(x, axis=-1, keepdims=True), NORM_EPS)
    mcn, mnn, ngn = nrm(mu_c), nrm(mu_n), nrm(neg)
    pos = jnp.sum(mcn * mnn, axis=-1) / TEMPERATURE
    neg_sim = (mcn @ ngn.T) / TEMPERATURE
    logits = jnp.concatenate([pos[:, None], neg_sim], axis=1)
    contrastive = jnp.mean(jax.nn.logsumexp(logits, axis=1) - logits[:, 0])
    total = (W_TEMPORAL * temporal + W_UNCERTAINTY * uncertainty +
             W_PREDICTION * prediction + W_CONTRASTIVE * contrastive)
    return dict(temporal=temporal, uncertainty=uncertainty,
                prediction=prediction, contrastive=contrastive, total=total)


if __name__ == "__main__":
    key = jax.random.PRNGKey(0)
    kmc, kms, kmp, kmn, ktg, kng, kw, kb = jax.random.split(key, 8)

    B, D, T, N = 4, 16, 8, 6   # batch, regime dim, target dim, #negatives

    mu_current = jax.random.normal(kmc, (B, D), jnp.float32)
    sigma_current = jax.nn.softplus(jax.random.normal(kms, (B, D), jnp.float32))
    mu_previous = jax.random.normal(kmp, (B, D), jnp.float32)
    mu_next = jax.random.normal(kmn, (B, D), jnp.float32)
    regime_targets = jax.random.normal(ktg, (B, T), jnp.float32)
    negative_samples = jax.random.normal(kng, (N, D), jnp.float32)

    # TODO(synk): the PyTorch module creates a *fresh* nn.Linear(16, 8) inside
    # forward() each call; its random init is untranslatable, so deterministic
    # stand-in weights are passed explicitly instead.
    bound = 1.0 / np.sqrt(D)
    proj_w = jax.random.uniform(kw, (T, D), jnp.float32, -bound, bound)
    proj_b = jax.random.uniform(kb, (T,), jnp.float32, -bound, bound)

    # ---- single-instance path (matches the module forward) ----
    losses = rde_communication_loss(mu_current, sigma_current, mu_previous,
                                    mu_next, regime_targets, negative_samples,
                                    proj_w, proj_b)
    jax.block_until_ready(losses['total'])

    ref = reference_losses(mu_current, sigma_current, mu_previous, mu_next,
                           regime_targets, negative_samples, proj_w, proj_b)
    names = ('temporal', 'uncertainty', 'prediction', 'contrastive', 'total')
    for k in names:
        np.testing.assert_allclose(np.asarray(losses[k]), np.asarray(ref[k]),
                                   rtol=1e-4, atol=1e-5)

    # ---- instance-batched path (grid over instances, "parallel" axis) ----
    I = 3
    kk = jax.random.split(jax.random.PRNGKey(1), 6)
    mu_c_b = jax.random.normal(kk[0], (I, B, D), jnp.float32)
    sig_c_b = jax.nn.softplus(jax.random.normal(kk[1], (I, B, D), jnp.float32))
    mu_p_b = jax.random.normal(kk[2], (I, B, D), jnp.float32)
    mu_n_b = jax.random.normal(kk[3], (I, B, D), jnp.float32)
    tgt_b = jax.random.normal(kk[4], (I, B, T), jnp.float32)
    neg_b = jax.random.normal(kk[5], (I, N, D), jnp.float32)

    rows = rde_communication_loss_batched(mu_c_b, sig_c_b, mu_p_b, mu_n_b,
                                          tgt_b, neg_b, proj_w, proj_b)
    jax.block_until_ready(rows)
    rows_np = np.asarray(rows)
    for i in range(I):
        ref_i = reference_losses(mu_c_b[i], sig_c_b[i], mu_p_b[i], mu_n_b[i],
                                 tgt_b[i], neg_b[i], proj_w, proj_b)
        for lane_idx, k in enumerate(names):
            np.testing.assert_allclose(rows_np[i, lane_idx],
                                       np.asarray(ref_i[k]),
                                       rtol=1e-4, atol=1e-5)

    print("KERNEL_OK")
</pallas_src>

<mosaic_0001>
module attributes {stable_mosaic.version = 11 : i64} {
  func.func @rde_loss_kernel(%arg0: i32, %arg1: memref<1x4x16xf32, #tpu.memory_space<vmem>>, %arg2: memref<1x4x16xf32, #tpu.memory_space<vmem>>, %arg3: memref<1x4x16xf32, #tpu.memory_space<vmem>>, %arg4: memref<1x4x16xf32, #tpu.memory_space<vmem>>, %arg5: memref<1x4x8xf32, #tpu.memory_space<vmem>>, %arg6: memref<1x6x16xf32, #tpu.memory_space<vmem>>, %arg7: memref<8x16xf32, #tpu.memory_space<vmem>>, %arg8: memref<1x8xf32, #tpu.memory_space<vmem>>, %arg9: memref<1x1x8xf32, #tpu.memory_space<vmem>>) attributes {dimension_semantics = [#tpu.dimension_semantics<parallel>], iteration_bounds = array<i64: 1>, scalar_prefetch = 0 : i64, scratch_operands = 0 : i64, tpu.core_type = #tpu.core_type<tc>, window_params = [{transform_indices = @transform_0, window_bounds = array<i64: 1, 4, 16>}, {transform_indices = @transform_1, window_bounds = array<i64: 1, 4, 16>}, {transform_indices = @transform_2, window_bounds = array<i64: 1, 4, 16>}, {transform_indices = @transform_3, window_bounds = array<i64: 1, 4, 16>}, {transform_indices = @transform_4, window_bounds = array<i64: 1, 4, 8>}, {transform_indices = @transform_5, window_bounds = array<i64: 1, 6, 16>}, {pipeline_mode = #tpu.pipeline_mode<synchronous>, transform_indices = @transform_6, window_bounds = array<i64: 8, 16>}, {pipeline_mode = #tpu.pipeline_mode<synchronous>, transform_indices = @transform_7, window_bounds = array<i64: 1, 8>}, {transform_indices = @transform_8, window_bounds = array<i64: 1, 1, 8>}]} {
    %c0 = arith.constant 0 : index
    %c0_0 = arith.constant 0 : index
    %c0_1 = arith.constant 0 : index
    %0 = vector.load %arg1[%c0, %c0_0, %c0_1] : memref<1x4x16xf32, #tpu.memory_space<vmem>>, vector<1x4x16xf32>
    %1 = vector.shape_cast %0 : vector<1x4x16xf32> to vector<4x16xf32>
    %c0_2 = arith.constant 0 : index
    %c0_3 = arith.constant 0 : index
    %c0_4 = arith.constant 0 : index
    %2 = vector.load %arg2[%c0_2, %c0_3, %c0_4] : memref<1x4x16xf32, #tpu.memory_space<vmem>>, vector<1x4x16xf32>
    %3 = vector.shape_cast %2 : vector<1x4x16xf32> to vector<4x16xf32>
    %c0_5 = arith.constant 0 : index
    %c0_6 = arith.constant 0 : index
    %c0_7 = arith.constant 0 : index
    %4 = vector.load %arg3[%c0_5, %c0_6, %c0_7] : memref<1x4x16xf32, #tpu.memory_space<vmem>>, vector<1x4x16xf32>
    %5 = vector.shape_cast %4 : vector<1x4x16xf32> to vector<4x16xf32>
    %c0_8 = arith.constant 0 : index
    %c0_9 = arith.constant 0 : index
    %c0_10 = arith.constant 0 : index
    %6 = vector.load %arg4[%c0_8, %c0_9, %c0_10] : memref<1x4x16xf32, #tpu.memory_space<vmem>>, vector<1x4x16xf32>
    %7 = vector.shape_cast %6 : vector<1x4x16xf32> to vector<4x16xf32>
    %c0_11 = arith.constant 0 : index
    %c0_12 = arith.constant 0 : index
    %c0_13 = arith.constant 0 : index
    %8 = vector.load %arg5[%c0_11, %c0_12, %c0_13] : memref<1x4x8xf32, #tpu.memory_space<vmem>>, vector<1x4x8xf32>
    %9 = vector.shape_cast %8 : vector<1x4x8xf32> to vector<4x8xf32>
    %c0_14 = arith.constant 0 : index
    %c0_15 = arith.constant 0 : index
    %c0_16 = arith.constant 0 : index
    %10 = vector.load %arg6[%c0_14, %c0_15, %c0_16] : memref<1x6x16xf32, #tpu.memory_space<vmem>>, vector<1x6x16xf32>
    %11 = vector.shape_cast %10 : vector<1x6x16xf32> to vector<6x16xf32>
    %c0_17 = arith.constant 0 : index
    %c0_18 = arith.constant 0 : index
    %12 = vector.load %arg7[%c0_17, %c0_18] : memref<8x16xf32, #tpu.memory_space<vmem>>, vector<8x16xf32>
    %c0_19 = arith.constant 0 : index
    %c0_20 = arith.constant 0 : index
    %13 = vector.load %arg8[%c0_19, %c0_20] : memref<1x8xf32, #tpu.memory_space<vmem>>, vector<1x8xf32>
    %14 = arith.subf %1, %5 : vector<4x16xf32>
    %15 = arith.mulf %14, %14 : vector<4x16xf32>
    %cst = arith.constant dense<0.000000e+00> : vector<4xf32>
    %16 = vector.multi_reduction <add>, %15, %cst [1] : vector<4x16xf32> to vector<4xf32>
    %17 = vector.shape_cast %16 : vector<4xf32> to vector<4x1xf32>
    %18 = math.sqrt %17 : vector<4x1xf32>
    %cst_21 = arith.constant dense<0.000000e+00> : vector<4xf32>
    %19 = vector.multi_reduction <add>, %3, %cst_21 [1] : vector<4x16xf32> to vector<4xf32>
    %20 = vector.shape_cast %19 : vector<4xf32> to vector<4x1xf32>
    %cst_22 = arith.constant 1.600000e+01 : f32
    %21 = vector.broadcast %cst_22 : f32 to vector<4x1xf32>
    %22 = arith.divf %20, %21 : vector<4x1xf32>
    %cst_23 = arith.constant 1.000000e+00 : f32
    %23 = vector.broadcast %cst_23 : f32 to vector<4x1xf32>
    %24 = arith.addf %23, %22 : vector<4x1xf32>
    %cst_24 = arith.constant 1.000000e+00 : f32
    %25 = vector.broadcast %cst_24 : f32 to vector<4x1xf32>
    %26 = arith.divf %25, %24 : vector<4x1xf32>
    %27 = arith.mulf %26, %17 : vector<4x1xf32>
    %cst_25 = arith.constant 5.000000e-01 : f32
    %28 = vector.broadcast %cst_25 : f32 to vector<4x1xf32>
    %29 = arith.mulf %28, %18 : vector<4x1xf32>
    %30 = arith.addf %27, %29 : vector<4x1xf32>
    %31 = vector.shape_cast %30 : vector<4x1xf32> to vector<1x4x1xf32>
    %cst_26 = arith.constant dense<0.000000e+00> : vector<1xf32>
    %32 = vector.multi_reduction <add>, %31, %cst_26 [1, 2] : vector<1x4x1xf32> to vector<1xf32>
    %33 = vector.shape_cast %32 : vector<1xf32> to vector<1x1x1xf32>
    %34 = vector.extract %33[0, 0, 0] : f32 from vector<1x1x1xf32>
    %35 = vector.broadcast %34 : f32 to vector<1x1xf32>
    %cst_27 = arith.constant 2.500000e-01 : f32
    %36 = vector.broadcast %cst_27 : f32 to vector<1x1xf32>
    %37 = arith.mulf %35, %36 : vector<1x1xf32>
    %cst_28 = arith.constant dense<0.000000e+00> : vector<4x8xf32>
    %38 = tpu.matmul %1, %12, %cst_28 {dimension_numbers = #tpu.dot_dimension_numbers<[1], [1], [0], [0], [0, 0, 1, 0], [], []>} : vector<4x16xf32>, vector<8x16xf32>, vector<4x8xf32> -> vector<4x8xf32>
    %39 = vector.broadcast %13 : vector<1x8xf32> to vector<4x8xf32>
    %40 = arith.addf %38, %39 : vector<4x8xf32>
    %cst_29 = arith.constant dense<0.000000e+00> : vector<4x8xf32>
    %41 = tpu.matmul %3, %12, %cst_29 {dimension_numbers = #tpu.dot_dimension_numbers<[1], [1], [0], [0], [0, 0, 1, 0], [], []>} : vector<4x16xf32>, vector<8x16xf32>, vector<4x8xf32> -> vector<4x8xf32>
    %42 = vector.broadcast %13 : vector<1x8xf32> to vector<4x8xf32>
    %43 = arith.addf %41, %42 : vector<4x8xf32>
    %44 = arith.mulf %43, %43 : vector<4x8xf32>
    %cst_30 = arith.constant 9.99999997E-7 : f32
    %45 = vector.broadcast %cst_30 : f32 to vector<4x8xf32>
    %46 = arith.addf %44, %45 : vector<4x8xf32>
    %47 = arith.subf %40, %9 : vector<4x8xf32>
    %48 = arith.mulf %47, %47 : vector<4x8xf32>
    %49 = arith.divf %48, %46 : vector<4x8xf32>
    %50 = math.log %46 : vector<4x8xf32>
    %51 = arith.addf %49, %50 : vector<4x8xf32>
    %cst_31 = arith.constant 5.000000e-01 : f32
    %52 = vector.broadcast %cst_31 : f32 to vector<4x8xf32>
    %53 = arith.mulf %52, %51 : vector<4x8xf32>
    %54 = vector.shape_cast %53 : vector<4x8xf32> to vector<1x4x8xf32>
    %cst_32 = arith.constant dense<0.000000e+00> : vector<1xf32>
    %55 = vector.multi_reduction <add>, %54, %cst_32 [1, 2] : vector<1x4x8xf32> to vector<1xf32>
    %56 = vector.shape_cast %55 : vector<1xf32> to vector<1x1x1xf32>
    %57 = vector.extract %56[0, 0, 0] : f32 from vector<1x1x1xf32>
    %58 = vector.broadcast %57 : f32 to vector<1x1xf32>
    %cst_33 = arith.constant 3.125000e-02 : f32
    %59 = vector.broadcast %cst_33 : f32 to vector<1x1xf32>
    %60 = arith.mulf %58, %59 : vector<1x1xf32>
    %61 = arith.subf %1, %7 : vector<4x16xf32>
    %62 = arith.mulf %61, %61 : vector<4x16xf32>
    %63 = vector.shape_cast %62 : vector<4x16xf32> to vector<1x4x16xf32>
    %cst_34 = arith.constant dense<0.000000e+00> : vector<1xf32>
    %64 = vector.multi_reduction <add>, %63, %cst_34 [1, 2] : vector<1x4x16xf32> to vector<1xf32>
    %65 = vector.shape_cast %64 : vector<1xf32> to vector<1x1x1xf32>
    %66 = vector.extract %65[0, 0, 0] : f32 from vector<1x1x1xf32>
    %67 = vector.broadcast %66 : f32 to vector<1x1xf32>
    %cst_35 = arith.constant 1.562500e-02 : f32
    %68 = vector.broadcast %cst_35 : f32 to vector<1x1xf32>
    %69 = arith.mulf %67, %68 : vector<1x1xf32>
    %70 = arith.mulf %1, %1 : vector<4x16xf32>
    %cst_36 = arith.constant dense<0.000000e+00> : vector<4xf32>
    %71 = vector.multi_reduction <add>, %70, %cst_36 [1] : vector<4x16xf32> to vector<4xf32>
    %72 = vector.shape_cast %71 : vector<4xf32> to vector<4x1xf32>
    %cst_37 = arith.constant 1.000000e-24 : f32
    %73 = vector.broadcast %cst_37 : f32 to vector<4x1xf32>
    %74 = arith.maximumf %72, %73 : vector<4x1xf32>
    %75 = math.rsqrt %74 : vector<4x1xf32>
    %76 = arith.mulf %7, %7 : vector<4x16xf32>
    %cst_38 = arith.constant dense<0.000000e+00> : vector<4xf32>
    %77 = vector.multi_reduction <add>, %76, %cst_38 [1] : vector<4x16xf32> to vector<4xf32>
    %78 = vector.shape_cast %77 : vector<4xf32> to vector<4x1xf32>
    %cst_39 = arith.constant 1.000000e-24 : f32
    %79 = vector.broadcast %cst_39 : f32 to vector<4x1xf32>
    %80 = arith.maximumf %78, %79 : vector<4x1xf32>
    %81 = math.rsqrt %80 : vector<4x1xf32>
    %82 = arith.mulf %11, %11 : vector<6x16xf32>
    %cst_40 = arith.constant dense<0.000000e+00> : vector<6xf32>
    %83 = vector.multi_reduction <add>, %82, %cst_40 [1] : vector<6x16xf32> to vector<6xf32>
    %84 = vector.shape_cast %83 : vector<6xf32> to vector<6x1xf32>
    %cst_41 = arith.constant 1.000000e-24 : f32
    %85 = vector.broadcast %cst_41 : f32 to vector<6x1xf32>
    %86 = arith.maximumf %84, %85 : vector<6x1xf32>
    %87 = math.rsqrt %86 : vector<6x1xf32>
    %88 = vector.broadcast %75 : vector<4x1xf32> to vector<4x16xf32>
    %89 = arith.mulf %1, %88 : vector<4x16xf32>
    %90 = vector.broadcast %81 : vector<4x1xf32> to vector<4x16xf32>
    %91 = arith.mulf %7, %90 : vector<4x16xf32>
    %92 = vector.broadcast %87 : vector<6x1xf32> to vector<6x16xf32>
    %93 = arith.mulf %11, %92 : vector<6x16xf32>
    %94 = arith.mulf %89, %91 : vector<4x16xf32>
    %cst_42 = arith.constant dense<0.000000e+00> : vector<4xf32>
    %95 = vector.multi_reduction <add>, %94, %cst_42 [1] : vector<4x16xf32> to vector<4xf32>
    %96 = vector.shape_cast %95 : vector<4xf32> to vector<4x1xf32>
    %cst_43 = arith.constant 14.2857141 : f32
    %97 = vector.broadcast %cst_43 : f32 to vector<4x1xf32>
    %98 = arith.mulf %96, %97 : vector<4x1xf32>
    %cst_44 = arith.constant dense<0.000000e+00> : vector<4x6xf32>
    %99 = tpu.matmul %89, %93, %cst_44 {dimension_numbers = #tpu.dot_dimension_numbers<[1], [1], [0], [0], [0, 0, 1, 0], [], []>} : vector<4x16xf32>, vector<6x16xf32>, vector<4x6xf32> -> vector<4x6xf32>
    %cst_45 = arith.constant 14.2857141 : f32
    %100 = vector.broadcast %cst_45 : f32 to vector<4x6xf32>
    %101 = arith.mulf %99, %100 : vector<4x6xf32>
    %cst_46 = arith.constant dense<0xFF800000> : vector<4xf32>
    %102 = vector.multi_reduction <maximumf>, %101, %cst_46 [1] : vector<4x6xf32> to vector<4xf32>
    %103 = vector.shape_cast %102 : vector<4xf32> to vector<4x1xf32>
    %104 = arith.maximumf %98, %103 : vector<4x1xf32>
    %105 = arith.subf %98, %104 : vector<4x1xf32>
    %106 = math.exp %105 : vector<4x1xf32>
    %107 = vector.broadcast %104 : vector<4x1xf32> to vector<4x6xf32>
    %108 = arith.subf %101, %107 : vector<4x6xf32>
    %109 = math.exp %108 : vector<4x6xf32>
    %cst_47 = arith.constant dense<0.000000e+00> : vector<4xf32>
    %110 = vector.multi_reduction <add>, %109, %cst_47 [1] : vector<4x6xf32> to vector<4xf32>
    %111 = vector.shape_cast %110 : vector<4xf32> to vector<4x1xf32>
    %112 = arith.addf %106, %111 : vector<4x1xf32>
    %113 = math.log %112 : vector<4x1xf32>
    %114 = arith.addf %104, %113 : vector<4x1xf32>
    %115 = arith.subf %114, %98 : vector<4x1xf32>
    %116 = vector.shape_cast %115 : vector<4x1xf32> to vector<1x4x1xf32>
    %cst_48 = arith.constant dense<0.000000e+00> : vector<1xf32>
    %117 = vector.multi_reduction <add>, %116, %cst_48 [1, 2] : vector<1x4x1xf32> to vector<1xf32>
    %118 = vector.shape_cast %117 : vector<1xf32> to vector<1x1x1xf32>
    %119 = vector.extract %118[0, 0, 0] : f32 from vector<1x1x1xf32>
    %120 = vector.broadcast %119 : f32 to vector<1x1xf32>
    %cst_49 = arith.constant 2.500000e-01 : f32
    %121 = vector.broadcast %cst_49 : f32 to vector<1x1xf32>
    %122 = arith.mulf %120, %121 : vector<1x1xf32>
    %cst_50 = arith.constant 3.000000e-01 : f32
    %123 = vector.broadcast %cst_50 : f32 to vector<1x1xf32>
    %124 = arith.mulf %123, %37 : vector<1x1xf32>
    %cst_51 = arith.constant 4.000000e-01 : f32
    %125 = vector.broadcast %cst_51 : f32 to vector<1x1xf32>
    %126 = arith.mulf %125, %60 : vector<1x1xf32>
    %127 = arith.addf %124, %126 : vector<1x1xf32>
    %cst_52 = arith.constant 3.000000e-01 : f32
    %128 = vector.broadcast %cst_52 : f32 to vector<1x1xf32>
    %129 = arith.mulf %128, %69 : vector<1x1xf32>
    %130 = arith.addf %127, %129 : vector<1x1xf32>
    %cst_53 = arith.constant 1.000000e-01 : f32
    %131 = vector.broadcast %cst_53 : f32 to vector<1x1xf32>
    %132 = arith.mulf %131, %122 : vector<1x1xf32>
    %133 = arith.addf %130, %132 : vector<1x1xf32>
    %134 = tpu.iota {dimensions = array<i32: 1>} : vector<1x8xi32>
    %c0_i32 = arith.constant 0 : i32
    %135 = vector.broadcast %c0_i32 : i32 to vector<1x8xi32>
    %136 = arith.cmpi eq, %134, %135 : vector<1x8xi32>
    %c1_i32 = arith.constant 1 : i32
    %137 = vector.broadcast %c1_i32 : i32 to vector<1x8xi32>
    %138 = arith.cmpi eq, %134, %137 : vector<1x8xi32>
    %c2_i32 = arith.constant 2 : i32
    %139 = vector.broadcast %c2_i32 : i32 to vector<1x8xi32>
    %140 = arith.cmpi eq, %134, %139 : vector<1x8xi32>
    %c3_i32 = arith.constant 3 : i32
    %141 = vector.broadcast %c3_i32 : i32 to vector<1x8xi32>
    %142 = arith.cmpi eq, %134, %141 : vector<1x8xi32>
    %c4_i32 = arith.constant 4 : i32
    %143 = vector.broadcast %c4_i32 : i32 to vector<1x8xi32>
    %144 = arith.cmpi eq, %134, %143 : vector<1x8xi32>
    %cst_54 = arith.constant 0.000000e+00 : f32
    %145 = vector.shape_cast %133 : vector<1x1xf32> to vector<1x1xf32>
    %146 = vector.broadcast %145 : vector<1x1xf32> to vector<1x8xf32>
    %147 = vector.broadcast %cst_54 : f32 to vector<1x8xf32>
    %148 = arith.select %144, %146, %147 : vector<1x8xi1>, vector<1x8xf32>
    %149 = vector.shape_cast %122 : vector<1x1xf32> to vector<1x1xf32>
    %150 = vector.broadcast %149 : vector<1x1xf32> to vector<1x8xf32>
    %151 = arith.select %142, %150, %148 : vector<1x8xi1>, vector<1x8xf32>
    %152 = vector.shape_cast %69 : vector<1x1xf32> to vector<1x1xf32>
    %153 = vector.broadcast %152 : vector<1x1xf32> to vector<1x8xf32>
    %154 = arith.select %140, %153, %151 : vector<1x8xi1>, vector<1x8xf32>
    %155 = vector.shape_cast %60 : vector<1x1xf32> to vector<1x1xf32>
    %156 = vector.broadcast %155 : vector<1x1xf32> to vector<1x8xf32>
    %157 = arith.select %138, %156, %154 : vector<1x8xi1>, vector<1x8xf32>
    %158 = vector.shape_cast %37 : vector<1x1xf32> to vector<1x1xf32>
    %159 = vector.broadcast %158 : vector<1x1xf32> to vector<1x8xf32>
    %160 = arith.select %136, %159, %157 : vector<1x8xi1>, vector<1x8xf32>
    %c0_55 = arith.constant 0 : index
    %c0_56 = arith.constant 0 : index
    %c0_57 = arith.constant 0 : index
    %161 = vector.load %arg9[%c0_55, %c0_56, %c0_57] : memref<1x1x8xf32, #tpu.memory_space<vmem>>, vector<1x1x8xf32>
    %162 = vector.shape_cast %161 : vector<1x1x8xf32> to vector<1x8xf32>
    %163 = vector.shape_cast %160 : vector<1x8xf32> to vector<1x1x8xf32>
    tpu.vector_store %arg9[%c0_55, %c0_56, %c0_57], %163 {strides = array<i32>} : memref<1x1x8xf32, #tpu.memory_space<vmem>>, vector<1x1x8xf32>,
    return
  }
  func.func @transform_0(%arg0: i32) -> (i32, i32, i32) {
    %c0_i32 = arith.constant 0 : i32
    %c0_i32_0 = arith.constant 0 : i32
    %c0_i32_1 = arith.constant 0 : i32
    return %arg0, %c0_i32, %c0_i32_0 : i32, i32, i32
  }
  func.func @transform_1(%arg0: i32) -> (i32, i32, i32) {
    %c0_i32 = arith.constant 0 : i32
    %c0_i32_0 = arith.constant 0 : i32
    %c0_i32_1 = arith.constant 0 : i32
    return %arg0, %c0_i32, %c0_i32_0 : i32, i32, i32
  }
  func.func @transform_2(%arg0: i32) -> (i32, i32, i32) {
    %c0_i32 = arith.constant 0 : i32
    %c0_i32_0 = arith.constant 0 : i32
    %c0_i32_1 = arith.constant 0 : i32
    return %arg0, %c0_i32, %c0_i32_0 : i32, i32, i32
  }
  func.func @transform_3(%arg0: i32) -> (i32, i32, i32) {
    %c0_i32 = arith.constant 0 : i32
    %c0_i32_0 = arith.constant 0 : i32
    %c0_i32_1 = arith.constant 0 : i32
    return %arg0, %c0_i32, %c0_i32_0 : i32, i32, i32
  }
  func.func @transform_4(%arg0: i32) -> (i32, i32, i32) {
    %c0_i32 = arith.constant 0 : i32
    %c0_i32_0 = arith.constant 0 : i32
    %c0_i32_1 = arith.constant 0 : i32
    return %arg0, %c0_i32, %c0_i32_0 : i32, i32, i32
  }
  func.func @transform_5(%arg0: i32) -> (i32, i32, i32) {
    %c0_i32 = arith.constant 0 : i32
    %c0_i32_0 = arith.constant 0 : i32
    %c0_i32_1 = arith.constant 0 : i32
    return %arg0, %c0_i32, %c0_i32_0 : i32, i32, i32
  }
  func.func @transform_6(%arg0: i32) -> (i32, i32) {
    %c0_i32 = arith.constant 0 : i32
    %c0_i32_0 = arith.constant 0 : i32
    %c0_i32_1 = arith.constant 0 : i32
    return %c0_i32, %c0_i32_0 : i32, i32
  }
  func.func @transform_7(%arg0: i32) -> (i32, i32) {
    %c0_i32 = arith.constant 0 : i32
    %c0_i32_0 = arith.constant 0 : i32
    %c0_i32_1 = arith.constant 0 : i32
    return %c0_i32, %c0_i32_0 : i32, i32
  }
  func.func @transform_8(%arg0: i32) -> (i32, i32, i32) {
    %c0_i32 = arith.constant 0 : i32
    %c0_i32_0 = arith.constant 0 : i32
    %c0_i32_1 = arith.constant 0 : i32
    return %arg0, %c0_i32, %c0_i32_0 : i32, i32, i32
  }
}

</mosaic_0001>

<llo_original>
// kernel: tpu_custom_call.1
$region0: #{tpu_custom_call.1}
  #allocation0 [shape = 'u32[]', space=smem, size = 0x4, offset = 0x4, fixed_abs, tag = 'smem constant byte address 0x4 - core index']
  #allocation1 [shape = 'u32[144,128]{1,0:T(1,128)}', space=vmem, size = 0x12000, scoped, tag = 'internal scratch']
  %s0 = inlined_call_operand.vmem [shape: f32[1,4,16], index: 0, kind: input, shape index: {}]
  %s1 = inlined_call_operand.vmem [shape: f32[1,4,16], index: 1, kind: input, shape index: {}]
  %s2 = inlined_call_operand.hbm [shape: f32[1,4,16], index: 2, kind: input, shape index: {}]
  %s3 = inlined_call_operand.hbm [shape: f32[1,4,16], index: 3, kind: input, shape index: {}]
  %s4 = inlined_call_operand.vmem [shape: f32[1,4,8], index: 4, kind: input, shape index: {}]
  %s5 = inlined_call_operand.vmem [shape: f32[1,6,16], index: 5, kind: input, shape index: {}]
  %s6 = inlined_call_operand.vmem [shape: f32[8,16], index: 6, kind: input, shape index: {}]
  %s7 = inlined_call_operand.vmem [shape: f32[1,8], index: 7, kind: input, shape index: {}]
  %s8 = inlined_call_operand.hbm [shape: f32[1,1,8], index: 8, kind: output, shape index: {}]
  %s9 = sld [smem:[#allocation0]]
  $region50: #{tpu_custom_call.1} parent=0
    _
  %s11 = ssub.s32 1, %s9
  %s12 = scalar_select 0, %s11, %s9
  $region1: #{tpu_custom_call.1} parent=0
    #allocation2 [shape = 'u8[2048]{0}', space=vmem, size = 0x800, scoped, tag = 'input window, operand 2, single buffered']
    #allocation3 [shape = 's32[1]{0}', space=sflag, size = 0x4, scoped, tag = 'scoped memory for tpu_custom_call.1']
    #allocation4 [shape = 's32[1]{0}', space=sflag, size = 0x4, scoped, tag = 'scoped memory for tpu_custom_call.1']
    #allocation5 [shape = 'u8[2048]{0}', space=vmem, size = 0x800, scoped, tag = 'input window, operand 3, single buffered']
    #allocation6 [shape = 's32[1]{0}', space=sflag, size = 0x4, scoped, tag = 'scoped memory for tpu_custom_call.1']
    #allocation7 [shape = 'u8[512]{0}', space=vmem, size = 0x400, scoped, tag = 'output window, operand 0, single buffered']
    %13 = vsyncpa [#allocation3], 0
    %14 = vsyncpa [#allocation6], 0
    %15 = vsyncpa [#allocation4], 0
    // Predicated region
    $region2: #{tpu_custom_call.1} parent=1 // pred_check
      _
    $region3: #{tpu_custom_call.1} parent=1 // pred_check_branch
      %17 = sbr.rel (0) target = $region5
    $region4: #{tpu_custom_call.1} parent=1 // pred_region
      _
    $region5: #{tpu_custom_call.1} parent=1 // pred_fallthru
      _
    // Predicated region
    $region6: #{tpu_custom_call.1} parent=1 // pred_check
      _
    $region7: #{tpu_custom_call.1} parent=1 // pred_check_branch
      %19 = sbr.rel (0) target = $region9
    $region8: #{tpu_custom_call.1} parent=1 // pred_region
      _
    $region9: #{tpu_custom_call.1} parent=1 // pred_fallthru
      _
    // Predicated region
    $region10: #{tpu_custom_call.1} parent=1 // pred_check
      _
    $region11: #{tpu_custom_call.1} parent=1 // pred_check_branch
      %21 = sbr.rel (0) target = $region13
    $region12: #{tpu_custom_call.1} parent=1 // pred_region
      %s23 = ssub.s32 64, 64
      %24 = vsyncadd [#allocation3], %s23
      %s26 = sshll.u32 [#allocation2], 4
      %s27 = int_to_ptr.vmem [resolvable:$true] %s26
      %29 = dma.hbm_to_vmem [thread:$0]  %s2, 64, %s27, [#allocation3]
    $region13: #{tpu_custom_call.1} parent=1 // pred_fallthru
      _
    // Predicated region
    $region14: #{tpu_custom_call.1} parent=1 // pred_check
      _
    $region15: #{tpu_custom_call.1} parent=1 // pred_check_branch
      %31 = sbr.rel (0) target = $region17
    $region16: #{tpu_custom_call.1} parent=1 // pred_region
      %s33 = ssub.s32 64, 64
      %34 = vsyncadd [#allocation6], %s33
      %s36 = sshll.u32 [#allocation5], 4
      %s37 = int_to_ptr.vmem [resolvable:$true] %s36
      %39 = dma.hbm_to_vmem [thread:$0]  %s3, 64, %s37, [#allocation6]
    $region17: #{tpu_custom_call.1} parent=1 // pred_fallthru
      _
    // Predicated region
    $region18: #{tpu_custom_call.1} parent=1 // pred_check
      _
    $region19: #{tpu_custom_call.1} parent=1 // pred_check_branch
      %41 = sbr.rel (0) target = $region21
    $region20: #{tpu_custom_call.1} parent=1 // pred_region
      _
    $region21: #{tpu_custom_call.1} parent=1 // pred_fallthru
      _
    // Predicated region
    $region22: #{tpu_custom_call.1} parent=1 // pred_check
      _
    $region23: #{tpu_custom_call.1} parent=1 // pred_check_branch
      %43 = sbr.rel (0) target = $region25
    $region24: #{tpu_custom_call.1} parent=1 // pred_region
      _
    $region25: #{tpu_custom_call.1} parent=1 // pred_fallthru
      _
    // Predicated region
    $region26: #{tpu_custom_call.1} parent=1 // pred_check
      _
    $region27: #{tpu_custom_call.1} parent=1 // pred_check_branch
      %45 = sbr.rel (0) target = $region29
    $region28: #{tpu_custom_call.1} parent=1 // pred_region
      _
    $region29: #{tpu_custom_call.1} parent=1 // pred_fallthru
      _
    // Predicated region
    $region30: #{tpu_custom_call.1} parent=1 // pred_check
      _
    $region31: #{tpu_custom_call.1} parent=1 // pred_check_branch
      %47 = sbr.rel (0) target = $region33
    $region32: #{tpu_custom_call.1} parent=1 // pred_region
      _
    $region33: #{tpu_custom_call.1} parent=1 // pred_fallthru
      _
    // Predicated region
    $region34: #{tpu_custom_call.1} parent=1 // pred_check
      _
    $region35: #{tpu_custom_call.1} parent=1 // pred_check_branch
      %49 = sbr.rel (0) target = $region37
    $region36: #{tpu_custom_call.1} parent=1 // pred_region
      %50 = dma.done [#allocation3], 64
    $region37: #{tpu_custom_call.1} parent=1 // pred_fallthru
      _
    // Predicated region
    $region38: #{tpu_custom_call.1} parent=1 // pred_check
      _
    $region39: #{tpu_custom_call.1} parent=1 // pred_check_branch
      %52 = sbr.rel (0) target = $region41
    $region40: #{tpu_custom_call.1} parent=1 // pred_region
      %53 = dma.done [#allocation6], 64
    $region41: #{tpu_custom_call.1} parent=1 // pred_fallthru
      _
    %v54 = vld [vmem:[%s0] sm:$0xf]
    %v55 = vld [vmem:[%s1] sm:$0xf]
    %v56 = vld [vmem:[#allocation2] sm:$0xf]
    %v57 = vld [vmem:[#allocation5] sm:$0xf]
    %v58 = vld [vmem:[%s4] sm:$0xf]
    %v59 = vld [vmem:[%s5] sm:$0x3f]
    %v60 = vld [vmem:[%s6] sm:$0xff]
    %v61 = vld [vmem:[%s7] sm:$0x1]
    %v62 = vsub.f32 %v54, %v56
    %v63 = vmul.f32 %v62, %v62
    %vm64 = vcmask 125952
    %v65 = vsel %vm64, %v63, 0.0
    %66 = vadd.xlane.f32.xlu0 %v65
    %v67 = vpop.xlane.xlu0 %66
    %v68 = vrsqrt.pop %v67
    %v69 = vmul.f32 %v67, %v68
    %vm70 = vcmp.eq.f32.partialorder %v67, inf
    %v71 = vsel %vm70, %v67, %v69
    %vm72 = vcmp.eq.f32.partialorder %v67, 0.0
    %v73 = vand.u32 %v67, 2147483648
    %v74 = vsel %vm72, %v73, %v71
    %v75 = vsel %vm64, %v55, 0.0
    %76 = vadd.xlane.f32.xlu0 %v75
    %v77 = vpop.xlane.xlu0 %76
    %v78 = vrcp.pop 16.0
    %v79 = vmul.f32 %v77, %v78
    %v80 = vadd.f32 %v79, 1.0
    %v81 = vrcp.pop %v80
    %v82 = vmul.f32 1.0, %v81
    %v83 = vmul.f32 %v82, %v67
    %v84 = vmul.f32 %v74, 0.5
    %v85 = vadd.f32 %v83, %v84
    %vm86 = vcmask 3072
    %v87 = vsel %vm86, %v85, 0.0
    %88 = vadd.xlane.f32.xlu0 %v87
    %v89 = vpop.xlane.xlu0 %88
    %v90 = vrot.slane %v89, 4
    %v91 = vadd.f32 %v89, %v90
    %v92 = vrot.slane %v91, 2
    %v93 = vadd.f32 %v91, %v92
    %v94 = vrot.slane %v93, 1
    %v95 = vadd.f32 %v93, %v94
    %s96 = vtos %v95
    %v97 = vstv %s96
    %v98 = vmul.f32 %v97, 0.25
    %v100 = vlaneseq
    %v101 = vshrl.u32 %v100, 7
    %v102 = vsub.s32 0, %v101
    %v103 = vrot.slane %v61, %v102
    %vm105 = vcmask 130048
    %v107 = vsel %vm105, %v54, 0
    %v110 = vsel %vm105, %v60, 0
    %112 = vmatprep.subr.mxu0 0.0
    %113 = vmatpush1.xpose.msra.mxu0 %v110
    %114 = vmatprep.subr.mxu0 0.0
    %115 = vmatpush1.xpose.msra.mxu0 0.0
    %116 = vmatprep.subr.mxu0 0.0
    %117 = vmatpush1.xpose.msra.mxu0 0.0
    %118 = vmatprep.subr.mxu0 0.0
    %119 = vmatpush1.xpose.msra.mxu0 0.0
    %120 = vmatprep.subr.mxu0 0.0
    %121 = vmatpush1.xpose.msra.mxu0 0.0
    %122 = vmatprep.subr.mxu0 0.0
    %123 = vmatpush1.xpose.msra.mxu0 0.0
    %124 = vmatprep.subr.mxu0 0.0
    %125 = vmatpush1.xpose.msra.mxu0 0.0
    %126 = vmatprep.subr.mxu0 0.0
    %127 = vmatpush1.xpose.msra.mxu0 0.0
    %128 = vmatprep.subr.mxu0 0.0
    %129 = vmatpush1.xpose.msra.mxu0 0.0
    %130 = vmatprep.subr.mxu0 0.0
    %131 = vmatpush1.xpose.msra.mxu0 0.0
    %132 = vmatprep.subr.mxu0 0.0
    %133 = vmatpush1.xpose.msra.mxu0 0.0
    %134 = vmatprep.subr.mxu0 0.0
    %135 = vmatpush1.xpose.msra.mxu0 0.0
    %136 = vmatprep.subr.mxu0 0.0
    %137 = vmatpush1.xpose.msra.mxu0 0.0
    %138 = vmatprep.subr.mxu0 0.0
    %139 = vmatpush1.xpose.msra.mxu0 0.0
    %140 = vmatprep.subr.mxu0 0.0
    %141 = vmatpush1.xpose.msra.mxu0 0.0
    %142 = vmatprep.subr.mxu0 0.0
    %143 = vmatpush1.xpose.msra.mxu0 0.0
    %144 = vmatprep.subr.mxu0 0.0
    %145 = vmatpush1.xpose.msra.mxu0 0.0
    %146 = vmatprep.subr.mxu0 0.0
    %147 = vmatpush1.xpose.msra.mxu0 0.0
    %148 = vmatprep.subr.mxu0 0.0
    %149 = vmatpush1.xpose.msra.mxu0 0.0
    %150 = vmatprep.subr.mxu0 0.0
    %151 = vmatpush1.xpose.msra.mxu0 0.0
    %152 = vmatprep.subr.mxu0 0.0
    %153 = vmatpush1.xpose.msra.mxu0 0.0
    %154 = vmatprep.subr.mxu0 0.0
    %155 = vmatpush1.xpose.msra.mxu0 0.0
    %156 = vmatprep.subr.mxu0 0.0
    %157 = vmatpush1.xpose.msra.mxu0 0.0
    %158 = vmatprep.subr.mxu0 0.0
    %159 = vmatpush1.xpose.msra.mxu0 0.0
    %160 = vmatprep.subr.mxu0 0.0
    %161 = vmatpush1.xpose.msra.mxu0 0.0
    %162 = vmatprep.subr.mxu0 0.0
    %163 = vmatpush1.xpose.msra.mxu0 0.0
    %164 = vmatprep.subr.mxu0 0.0
    %165 = vmatpush1.xpose.msra.mxu0 0.0
    %166 = vmatprep.subr.mxu0 0.0
    %167 = vmatpush1.xpose.msra.mxu0 0.0
    %168 = vmatprep.subr.mxu0 0.0
    %169 = vmatpush1.xpose.msra.mxu0 0.0
    %170 = vmatprep.subr.mxu0 0.0
    %171 = vmatpush1.xpose.msra.mxu0 0.0
    %172 = vmatprep.subr.mxu0 0.0
    %173 = vmatpush1.xpose.msra.mxu0 0.0
    %174 = vmatprep.subr.mxu0 0.0
    %175 = vmatpush1.xpose.msra.mxu0 0.0
    %176 = vmatprep.mubr.f32.mxu0 0.0
    %177 = vmatmul.mubr.f32.gmra.mrb[0].mxu0 %v107
    %v178 = vpop.f32.mrb[0].mxu0
    %v179 = vadd.f32 %v103, %v178
    %v180 = vpop.f32.mrb[0].mxu0
    %181 = vdwg.mxu0
    %v183 = vsel %vm105, %v55, 0
    %185 = vmatprep.subr.mxu0 0.0
    %186 = vmatpush1.xpose.msra.mxu0 %v110
    %187 = vmatprep.subr.mxu0 0.0
    %188 = vmatpush1.xpose.msra.mxu0 0.0
    %189 = vmatprep.subr.mxu0 0.0
    %190 = vmatpush1.xpose.msra.mxu0 0.0
    %191 = vmatprep.subr.mxu0 0.0
    %192 = vmatpush1.xpose.msra.mxu0 0.0
    %193 = vmatprep.subr.mxu0 0.0
    %194 = vmatpush1.xpose.msra.mxu0 0.0
    %195 = vmatprep.subr.mxu0 0.0
    %196 = vmatpush1.xpose.msra.mxu0 0.0
    %197 = vmatprep.subr.mxu0 0.0
    %198 = vmatpush1.xpose.msra.mxu0 0.0
    %199 = vmatprep.subr.mxu0 0.0
    %200 = vmatpush1.xpose.msra.mxu0 0.0
    %201 = vmatprep.subr.mxu0 0.0
    %202 = vmatpush1.xpose.msra.mxu0 0.0
    %203 = vmatprep.subr.mxu0 0.0
    %204 = vmatpush1.xpose.msra.mxu0 0.0
    %205 = vmatprep.subr.mxu0 0.0
    %206 = vmatpush1.xpose.msra.mxu0 0.0
    %207 = vmatprep.subr.mxu0 0.0
    %208 = vmatpush1.xpose.msra.mxu0 0.0
    %209 = vmatprep.subr.mxu0 0.0
    %210 = vmatpush1.xpose.msra.mxu0 0.0
    %211 = vmatprep.subr.mxu0 0.0
    %212 = vmatpush1.xpose.msra.mxu0 0.0
    %213 = vmatprep.subr.mxu0 0.0
    %214 = vmatpush1.xpose.msra.mxu0 0.0
    %215 = vmatprep.subr.mxu0 0.0
    %216 = vmatpush1.xpose.msra.mxu0 0.0
    %217 = vmatprep.subr.mxu0 0.0
    %218 = vmatpush1.xpose.msra.mxu0 0.0
    %219 = vmatprep.subr.mxu0 0.0
    %220 = vmatpush1.xpose.msra.mxu0 0.0
    %221 = vmatprep.subr.mxu0 0.0
    %222 = vmatpush1.xpose.msra.mxu0 0.0
    %223 = vmatprep.subr.mxu0 0.0
    %224 = vmatpush1.xpose.msra.mxu0 0.0
    %225 = vmatprep.subr.mxu0 0.0
    %226 = vmatpush1.xpose.msra.mxu0 0.0
    %227 = vmatprep.subr.mxu0 0.0
    %228 = vmatpush1.xpose.msra.mxu0 0.0
    %229 = vmatprep.subr.mxu0 0.0
    %230 = vmatpush1.xpose.msra.mxu0 0.0
    %231 = vmatprep.subr.mxu0 0.0
    %232 = vmatpush1.xpose.msra.mxu0 0.0
    %233 = vmatprep.subr.mxu0 0.0
    %234 = vmatpush1.xpose.msra.mxu0 0.0
    %235 = vmatprep.subr.mxu0 0.0
    %236 = vmatpush1.xpose.msra.mxu0 0.0
    %237 = vmatprep.subr.mxu0 0.0
    %238 = vmatpush1.xpose.msra.mxu0 0.0
    %239 = vmatprep.subr.mxu0 0.0
    %240 = vmatpush1.xpose.msra.mxu0 0.0
    %241 = vmatprep.subr.mxu0 0.0
    %242 = vmatpush1.xpose.msra.mxu0 0.0
    %243 = vmatprep.subr.mxu0 0.0
    %244 = vmatpush1.xpose.msra.mxu0 0.0
    %245 = vmatprep.subr.mxu0 0.0
    %246 = vmatpush1.xpose.msra.mxu0 0.0
    %247 = vmatprep.subr.mxu0 0.0
    %248 = vmatpush1.xpose.msra.mxu0 0.0
    %249 = vmatprep.mubr.f32.mxu0 0.0
    %250 = vmatmul.mubr.f32.gmra.mrb[0].mxu0 %v183
    %v251 = vpop.f32.mrb[0].mxu0
    %v252 = vadd.f32 %v103, %v251
    %v253 = vpop.f32.mrb[0].mxu0
    %254 = vdwg.mxu0
    %v255 = vmul.f32 %v252, %v252
    %v256 = vadd.f32 %v255, 1e-06
    %v257 = vsub.f32 %v179, %v58
    %v258 = vmul.f32 %v257, %v257
    %v259 = vrcp.pop %v256
    %v260 = vmul.f32 %v258, %v259
    %v261 = vlog2.pop %v256
    %v262 = vmul.f32 %v261, 0.6931472
    %v263 = vadd.f32 %v260, %v262
    %v264 = vmul.f32 %v263, 0.5
    %vm265 = vcmask 60416
    %v266 = vsel %vm265, %v264, 0.0
    %267 = vadd.xlane.f32.xlu0 %v266
    %v268 = vpop.xlane.xlu0 %267
    %v269 = vrot.slane %v268, 4
    %v270 = vadd.f32 %v268, %v269
    %v271 = vrot.slane %v270, 2
    %v272 = vadd.f32 %v270, %v271
    %v273 = vrot.slane %v272, 1
    %v274 = vadd.f32 %v272, %v273
    %s275 = vtos %v274
    %v276 = vstv %s275
    %v277 = vmul.f32 %v276, 0.03125
    %v278 = vsub.f32 %v54, %v57
    %v279 = vmul.f32 %v278, %v278
    %v280 = vsel %vm64, %v279, 0.0
    %281 = vadd.xlane.f32.xlu0 %v280
    %v282 = vpop.xlane.xlu0 %281
    %v283 = vrot.slane %v282, 4
    %v284 = vadd.f32 %v282, %v283
    %v285 = vrot.slane %v284, 2
    %v286 = vadd.f32 %v284, %v285
    %v287 = vrot.slane %v286, 1
    %v288 = vadd.f32 %v286, %v287
    %s289 = vtos %v288
    %v290 = vstv %s289
    %v291 = vmul.f32 %v290, 0.015625
    %v292 = vmul.f32 %v54, %v54
    %v293 = vsel %vm64, %v292, 0.0
    %294 = vadd.xlane.f32.xlu0 %v293
    %v295 = vpop.xlane.xlu0 %294
    %v296 = vmax.f32 %v295, 1e-24
    %v297 = vrsqrt.pop %v296
    %v298 = vmul.f32 %v57, %v57
    %v299 = vsel %vm64, %v298, 0.0
    %300 = vadd.xlane.f32.xlu0 %v299
    %v301 = vpop.xlane.xlu0 %300
    %v302 = vmax.f32 %v301, 1e-24
    %v303 = vrsqrt.pop %v302
    %v304 = vmul.f32 %v59, %v59
    %vm305 = vcmask 128000
    %v306 = vsel %vm305, %v304, 0.0
    %307 = vadd.xlane.f32.xlu0 %v306
    %v308 = vpop.xlane.xlu0 %307
    %v309 = vmax.f32 %v308, 1e-24
    %v310 = vrsqrt.pop %v309
    %v311 = vmul.f32 %v54, %v297
    %v312 = vmul.f32 %v57, %v303
    %v313 = vmul.f32 %v59, %v310
    %v314 = vmul.f32 %v311, %v312
    %v315 = vsel %vm64, %v314, 0.0
    %316 = vadd.xlane.f32.xlu0 %v315
    %v317 = vpop.xlane.xlu0 %316
    %v318 = vmul.f32 %v317, 14.285714
    %v320 = vsel %vm105, %v311, 0
    %v323 = vsel %vm105, %v313, 0
    %325 = vmatprep.subr.mxu0 0.0
    %326 = vmatpush1.xpose.msra.mxu0 %v323
    %327 = vmatprep.subr.mxu0 0.0
    %328 = vmatpush1.xpose.msra.mxu0 0.0
    %329 = vmatprep.subr.mxu0 0.0
    %330 = vmatpush1.xpose.msra.mxu0 0.0
    %331 = vmatprep.subr.mxu0 0.0
    %332 = vmatpush1.xpose.msra.mxu0 0.0
    %333 = vmatprep.subr.mxu0 0.0
    %334 = vmatpush1.xpose.msra.mxu0 0.0
    %335 = vmatprep.subr.mxu0 0.0
    %336 = vmatpush1.xpose.msra.mxu0 0.0
    %337 = vmatprep.subr.mxu0 0.0
    %338 = vmatpush1.xpose.msra.mxu0 0.0
    %339 = vmatprep.subr.mxu0 0.0
    %340 = vmatpush1.xpose.msra.mxu0 0.0
    %341 = vmatprep.subr.mxu0 0.0
    %342 = vmatpush1.xpose.msra.mxu0 0.0
    %343 = vmatprep.subr.mxu0 0.0
    %344 = vmatpush1.xpose.msra.mxu0 0.0
    %345 = vmatprep.subr.mxu0 0.0
    %346 = vmatpush1.xpose.msra.mxu0 0.0
    %347 = vmatprep.subr.mxu0 0.0
    %348 = vmatpush1.xpose.msra.mxu0 0.0
    %349 = vmatprep.subr.mxu0 0.0
    %350 = vmatpush1.xpose.msra.mxu0 0.0
    %351 = vmatprep.subr.mxu0 0.0
    %352 = vmatpush1.xpose.msra.mxu0 0.0
    %353 = vmatprep.subr.mxu0 0.0
    %354 = vmatpush1.xpose.msra.mxu0 0.0
    %355 = vmatprep.subr.mxu0 0.0
    %356 = vmatpush1.xpose.msra.mxu0 0.0
    %357 = vmatprep.subr.mxu0 0.0
    %358 = vmatpush1.xpose.msra.mxu0 0.0
    %359 = vmatprep.subr.mxu0 0.0
    %360 = vmatpush1.xpose.msra.mxu0 0.0
    %361 = vmatprep.subr.mxu0 0.0
    %362 = vmatpush1.xpose.msra.mxu0 0.0
    %363 = vmatprep.subr.mxu0 0.0
    %364 = vmatpush1.xpose.msra.mxu0 0.0
    %365 = vmatprep.subr.mxu0 0.0
    %366 = vmatpush1.xpose.msra.mxu0 0.0
    %367 = vmatprep.subr.mxu0 0.0
    %368 = vmatpush1.xpose.msra.mxu0 0.0
    %369 = vmatprep.subr.mxu0 0.0
    %370 = vmatpush1.xpose.msra.mxu0 0.0
    %371 = vmatprep.subr.mxu0 0.0
    %372 = vmatpush1.xpose.msra.mxu0 0.0
    %373 = vmatprep.subr.mxu0 0.0
    %374 = vmatpush1.xpose.msra.mxu0 0.0
    %375 = vmatprep.subr.mxu0 0.0
    %376 = vmatpush1.xpose.msra.mxu0 0.0
    %377 = vmatprep.subr.mxu0 0.0
    %378 = vmatpush1.xpose.msra.mxu0 0.0
    %379 = vmatprep.subr.mxu0 0.0
    %380 = vmatpush1.xpose.msra.mxu0 0.0
    %381 = vmatprep.subr.mxu0 0.0
    %382 = vmatpush1.xpose.msra.mxu0 0.0
    %383 = vmatprep.subr.mxu0 0.0
    %384 = vmatpush1.xpose.msra.mxu0 0.0
    %385 = vmatprep.subr.mxu0 0.0
    %386 = vmatpush1.xpose.msra.mxu0 0.0
    %387 = vmatprep.subr.mxu0 0.0
    %388 = vmatpush1.xpose.msra.mxu0 0.0
    %389 = vmatprep.mubr.f32.mxu0 0.0
    %390 = vmatmul.mubr.f32.gmra.mrb[0].mxu0 %v320
    %v391 = vpop.f32.mrb[0].mxu0
    %v392 = vadd.f32 0.0, %v391
    %v393 = vpop.f32.mrb[0].mxu0
    %394 = vdwg.mxu0
    %v395 = vmul.f32 %v392, 14.285714
    %vm396 = vcmask 44032
    %v397 = vsel %vm396, %v395, -inf
    %398 = vmax.xlane.f32.xlu0 %v397
    %v399 = vpop.xlane.xlu0 %398
    %v400 = vmax.f32 %v318, %v399
    %v401 = vsub.f32 %v318, %v400
    %v402 = vmul.f32 %v401, 1.442695
    %v403 = vpow.pop %v402
    %v404 = vsub.f32 %v395, %v400
    %v405 = vmul.f32 %v404, 1.442695
    %v406 = vpow.pop %v405
    %v407 = vsel %vm396, %v406, 0.0
    %408 = vadd.xlane.f32.xlu0 %v407
    %v409 = vpop.xlane.xlu0 %408
    %v410 = vadd.f32 %v403, %v409
    %v411 = vlog2.pop %v410
    %v412 = vmul.f32 %v411, 0.6931472
    %v413 = vadd.f32 %v400, %v412
    %v414 = vsub.f32 %v413, %v318
    %v415 = vsel %vm86, %v414, 0.0
    %416 = vadd.xlane.f32.xlu0 %v415
    %v417 = vpop.xlane.xlu0 %416
    %v418 = vrot.slane %v417, 4
    %v419 = vadd.f32 %v417, %v418
    %v420 = vrot.slane %v419, 2
    %v421 = vadd.f32 %v419, %v420
    %v422 = vrot.slane %v421, 1
    %v423 = vadd.f32 %v421, %v422
    %s424 = vtos %v423
    %v425 = vstv %s424
    %v426 = vmul.f32 %v425, 0.25
    %v427 = vmul.f32 %v98, 0.3
    %v428 = vmul.f32 %v277, 0.4
    %v429 = vadd.f32 %v427, %v428
    %v430 = vmul.f32 %v291, 0.3
    %v431 = vadd.f32 %v429, %v430
    %v432 = vmul.f32 %v426, 0.1
    %v433 = vadd.f32 %v431, %v432
    %v434 = vlaneseq
    %v435 = vand.u32 %v434, 127
    %vm436 = vcmp.eq.s32.totalorder %v435, 0
    %vm437 = vcmp.eq.s32.totalorder %v435, 1
    %vm438 = vcmp.eq.s32.totalorder %v435, 2
    %vm439 = vcmp.eq.s32.totalorder %v435, 3
    %vm440 = vcmp.eq.s32.totalorder %v435, 4
    %v441 = vsel %vm440, %v433, 0.0
    %v442 = vsel %vm439, %v426, %v441
    %v443 = vsel %vm438, %v291, %v442
    %v444 = vsel %vm437, %v277, %v443
    %v445 = vsel %vm436, %v98, %v444
    %vm446 = vcmask 57344
    %447 = vst.msk [vmem:[#allocation7] sm:$0x1] %vm446, %v445
    // Predicated region
    $region42: #{tpu_custom_call.1} parent=1 // pred_check
      _
    $region43: #{tpu_custom_call.1} parent=1 // pred_check_branch
      %449 = sbr.rel (0) target = $region45
    $region44: #{tpu_custom_call.1} parent=1 // pred_region
      %s451 = ssub.s32 16, 16
      %452 = vsyncadd [#allocation4], %s451
      %s454 = sshll.u32 [#allocation7], 4
      %s455 = int_to_ptr.vmem [resolvable:$true] %s454
      %457 = dma.vmem_to_hbm [thread:$0]  %s455, 16, %s8, [#allocation4]
    $region45: #{tpu_custom_call.1} parent=1 // pred_fallthru
      _
    // Predicated region
    $region46: #{tpu_custom_call.1} parent=1 // pred_check
      _
    $region47: #{tpu_custom_call.1} parent=1 // pred_check_branch
      %459 = sbr.rel (0) target = $region49
    $region48: #{tpu_custom_call.1} parent=1 // pred_region
      %460 = dma.done [#allocation4], 16
    $region49: #{tpu_custom_call.1} parent=1 // pred_fallthru
      _
    %461 = vsyncpa [#allocation3], 1
    %462 = vsyncpa [#allocation6], 1
    %463 = vsyncpa [#allocation4], 1

</llo_original>
